<compile_context>
chip_gen: v5e
topology: v5e:2x2
jax: 0.10.0
libtpu: 0.0.40
codegen_flags: <defaults>
</compile_context>

<pallas_src>
import jax
import jax.numpy as jnp
from jax.experimental import pallas as pl
from jax.experimental.pallas import tpu as pltpu

EPS = 1e-5                        # nn.InstanceNorm2d default eps
VMEM_LIMIT = 48 * 1024 * 1024     # fits v7x's 64 MiB physical VMEM, fine on v5e/v6e


def _round_up(x, m):
    return (x + m - 1) // m * m


def _largest_div_tile(dim, cap):
    """Largest multiple of 128 that divides `dim` (dim % 128 == 0) and <= cap."""
    best, t = 128, 128
    while t <= min(cap, dim):
        if dim % t == 0:
            best = t
        t += 128
    return best


# ----------------------------------------------------------------------------
# Kernel 1: InstanceNorm2d(affine=False) + FiLM + ReLU, fused (NHWC layout).
# Block: (1, H*W, ct) -> reduce over the spatial (sublane) axis per channel.
# ----------------------------------------------------------------------------
def film_relu_kernel(x_ref, f_ref, b_ref, o_ref):
    x = x_ref[...].astype(jnp.float32)                       # (1, HW, ct)
    mean = jnp.mean(x, axis=1, keepdims=True)                # single-pass moments
    msq = jnp.mean(x * x, axis=1, keepdims=True)
    var = jnp.maximum(msq - mean * mean, 0.0)                # clamp f32 cancellation
    normed = (x - mean) * jax.lax.rsqrt(var + EPS)
    out = normed * f_ref[...].astype(jnp.float32) + b_ref[...].astype(jnp.float32)
    o_ref[...] = jnp.maximum(out, 0.0).astype(o_ref.dtype)


def film_relu(x3, f3, b3):
    """x3: (N, HW, C) f32/bf16; f3/b3: (N, 1, C) -> (N, HW, C) bf16."""
    N, HW, C = x3.shape
    # Channel tiling: exact for per-channel moments; gives the pipeline more
    # grid steps than grid=(N,) when N is small, and caps per-step VMEM.
    ct = _largest_div_tile(C, 256) if C % 128 == 0 else C
    grid = (N, C // ct)
    return pl.pallas_call(
        film_relu_kernel,
        out_shape=jax.ShapeDtypeStruct((N, HW, C), jnp.bfloat16),
        grid=grid,
        in_specs=[pl.BlockSpec((1, HW, ct), lambda n, c: (n, 0, c)),
                  pl.BlockSpec((1, 1, ct), lambda n, c: (n, 0, c)),
                  pl.BlockSpec((1, 1, ct), lambda n, c: (n, 0, c))],
        out_specs=pl.BlockSpec((1, HW, ct), lambda n, c: (n, 0, c)),
        compiler_params=pltpu.CompilerParams(
            dimension_semantics=("parallel", "parallel"),
            vmem_limit_bytes=VMEM_LIMIT),
    )(x3, f3, b3)


# ----------------------------------------------------------------------------
# Kernel 2: K-tiled bf16 matmul + bias (+ optional fused residual).
# Grid = (M tiles, Cout tiles, K tiles); K trailing "arbitrary" with f32 VMEM acc.
# ----------------------------------------------------------------------------
def matmul_bias_kernel(a_ref, w_ref, b_ref, o_ref, acc_ref):
    @pl.when(pl.program_id(2) == 0)
    def _():
        acc_ref[...] = jnp.zeros_like(acc_ref)

    acc_ref[...] += jnp.dot(a_ref[...], w_ref[...],
                            preferred_element_type=jnp.float32)

    @pl.when(pl.program_id(2) == pl.num_programs(2) - 1)
    def _():
        o_ref[...] = (acc_ref[...] + b_ref[...]).astype(o_ref.dtype)


def matmul_bias_res_kernel(a_ref, w_ref, b_ref, r_ref, o_ref, acc_ref):
    @pl.when(pl.program_id(2) == 0)
    def _():
        acc_ref[...] = jnp.zeros_like(acc_ref)

    acc_ref[...] += jnp.dot(a_ref[...], w_ref[...],
                            preferred_element_type=jnp.float32)

    @pl.when(pl.program_id(2) == pl.num_programs(2) - 1)
    def _():
        o_ref[...] = (acc_ref[...] + b_ref[...] + r_ref[...]).astype(o_ref.dtype)


def _choose_tiles(M, K, Cp):
    """Tile selection: pad dims UP to the tile instead of collapsing to 128."""
    # M (rows): target 512, but keep >= 2 row tiles when M allows so both v7x
    # TensorCores get work on the parallel axis.
    Mp0 = _round_up(M, 128)
    if Mp0 <= 128:
        tm = 128
    else:
        tm = max(128, min(512, (Mp0 // 2) // 128 * 128))
    Mp = _round_up(M, tm)

    # N (cols): full padded width whenever it fits — no j re-streaming of A,
    # lane-dense output stores.
    if Cp <= 1024:
        tn, Np = Cp, Cp
    else:
        tn = 512
        Np = _round_up(Cp, tn)

    # K: big tiles (fewer grid steps / acc passes).  Prefer an exact multiple-
    # of-128 divisor >= 512; otherwise pad K up to a multiple of 1024.
    Kp0 = _round_up(K, 128)
    if Kp0 <= 1024:
        tk, Kp = Kp0, Kp0
    else:
        tk = _largest_div_tile(Kp0, 1024)
        if tk >= 512:
            Kp = Kp0
        else:
            tk = 1024
            Kp = _round_up(Kp0, tk)
    return tm, tn, tk, Mp, Np, Kp


def matmul_bias(a, w, b, res=None, out_dtype=jnp.float32):
    """(M, K) @ (K, Cp) + b [+ res] -> (M, Cp) out_dtype.  Cp % 128 == 0."""
    M, K = a.shape
    Kw, Cp = w.shape
    assert K == Kw and Cp % 128 == 0

    tm, tn, tk, Mp, Np, Kp = _choose_tiles(M, K, Cp)

    a = a.astype(jnp.bfloat16)
    w = w.astype(jnp.bfloat16)
    if (Mp, Kp) != (M, K):
        a = jnp.pad(a, ((0, Mp - M), (0, Kp - K)))
    if (Kp, Np) != (K, Cp):
        w = jnp.pad(w, ((0, Kp - K), (0, Np - Cp)))
    b2 = b.astype(jnp.float32).reshape(1, Cp)
    if Np != Cp:
        b2 = jnp.pad(b2, ((0, 0), (0, Np - Cp)))

    a_spec = pl.BlockSpec((tm, tk), lambda i, j, k: (i, k))
    w_spec = pl.BlockSpec((tk, tn), lambda i, j, k: (k, j))
    b_spec = pl.BlockSpec((1, tn), lambda i, j, k: (0, j))
    o_spec = pl.BlockSpec((tm, tn), lambda i, j, k: (i, j))
    grid = (Mp // tm, Np // tn, Kp // tk)

    def _call(kernel, in_specs, args):
        return pl.pallas_call(
            kernel,
            out_shape=jax.ShapeDtypeStruct((Mp, Np), out_dtype),
            grid_spec=pltpu.PrefetchScalarGridSpec(
                num_scalar_prefetch=0,
                grid=grid,
                in_specs=in_specs,
                out_specs=o_spec,
                scratch_shapes=[pltpu.VMEM((tm, tn), jnp.float32)]),
            compiler_params=pltpu.CompilerParams(
                dimension_semantics=("parallel", "parallel", "arbitrary"),
                vmem_limit_bytes=VMEM_LIMIT),
        )(*args)

    if res is None:
        out = _call(matmul_bias_kernel, [a_spec, w_spec, b_spec], (a, w, b2))
    else:
        r = res.astype(jnp.float32)
        if r.shape != (Mp, Np):
            r = jnp.pad(r, ((0, Mp - r.shape[0]), (0, Np - r.shape[1])))
        r_spec = pl.BlockSpec((tm, tn), lambda i, j, k: (i, j))
        out = _call(matmul_bias_res_kernel,
                    [a_spec, w_spec, b_spec, r_spec], (a, w, b2, r))

    if (Mp, Np) != (M, Cp):
        out = out[:M, :Cp]
    return out


# ----------------------------------------------------------------------------
# Glue: im2col patch extraction (NHWC, bf16 in -> bf16 patches), no compute.
# ----------------------------------------------------------------------------
def im2col(x_nhwc, ksize, stride, pad):
    N, H, W, C = x_nhwc.shape
    xp = jnp.pad(x_nhwc, ((0, 0), (pad, pad), (pad, pad), (0, 0)))
    Ho = (H + 2 * pad - ksize) // stride + 1
    Wo = (W + 2 * pad - ksize) // stride + 1
    taps = []
    for kh in range(ksize):
        for kw in range(ksize):
            taps.append(xp[:, kh:kh + stride * (Ho - 1) + 1:stride,
                           kw:kw + stride * (Wo - 1) + 1:stride, :])
    p = jnp.stack(taps, axis=3)                      # (N, Ho, Wo, K*K, C)
    return p.reshape(N * Ho * Wo, ksize * ksize * C), (N, Ho, Wo)


def _pad_cols(m2d, cp):
    return jnp.pad(m2d, ((0, 0), (0, cp - m2d.shape[1]))) if cp != m2d.shape[1] else m2d


def _pad_vec(v, cp):
    return jnp.pad(v, (0, cp - v.shape[0])) if cp != v.shape[0] else v


# ----------------------------------------------------------------------------
# wide_basic.forward
# ----------------------------------------------------------------------------
def wide_basic_forward(x, params, factor, bias, stride):
    # x: (N, Cin, H, W) float32, NCHW like the PyTorch module.
    N, Cin, H, W = x.shape
    planes = params["b1"].shape[0]
    Cp = _round_up(planes, 128)               # lane-dense padded output channels

    # One NCHW -> NHWC transpose at the module boundary; NHWC everywhere after.
    x_nhwc = jnp.transpose(x, (0, 2, 3, 1))

    # out1 = conv1(relu(film1(x, factor[0], bias[0])))
    h1 = film_relu(x_nhwc.reshape(N, H * W, Cin),
                   factor[0].reshape(N, 1, Cin),
                   bias[0].reshape(N, 1, Cin))                        # bf16
    a1, (_, H1, W1) = im2col(h1.reshape(N, H, W, Cin), 3, 1, 1)
    w1 = _pad_cols(params["w1"].reshape(9 * Cin, planes), Cp)
    out1 = matmul_bias(a1, w1, _pad_vec(params["b1"], Cp),
                       out_dtype=jnp.bfloat16)                        # (N*H1*W1, Cp) bf16

    # relu(film2(out1, factor[1], bias[1])) on the REAL planes channels only
    # (padded Cout columns are sliced away so conv2 runs K = 9*planes, not 9*Cp).
    out1 = out1.reshape(N, H1 * W1, Cp)[..., :planes]
    h2 = film_relu(out1,
                   factor[1].reshape(N, 1, planes),
                   bias[1].reshape(N, 1, planes))                     # bf16

    # conv2 (stride) with the shortcut fused as the matmul residual
    a2, (_, Ho, Wo) = im2col(h2.reshape(N, H1, W1, planes), 3, stride, 1)
    w2 = _pad_cols(params["w2"].reshape(9 * planes, planes), Cp)
    M2 = N * Ho * Wo

    if stride != 1 or Cin != planes:
        xs = x_nhwc[:, ::stride, ::stride, :].reshape(M2, Cin)
        ws = _pad_cols(params["ws"].reshape(Cin, planes), Cp)
        sc = matmul_bias(xs, ws, _pad_vec(params["bs"], Cp))          # (M2, Cp) f32
    else:
        sc = _pad_cols(x_nhwc.reshape(M2, Cin), Cp)

    out2 = matmul_bias(a2, w2, _pad_vec(params["b2"], Cp), res=sc)    # (M2, Cp) f32
    out2 = out2.reshape(N, Ho, Wo, Cp)[..., :planes]
    return jnp.transpose(out2, (0, 3, 1, 2))                          # NHWC -> NCHW


# ----------------------------------------------------------------------------
# Pure-JAX reference (for an in-script sanity check only).
# ----------------------------------------------------------------------------
def reference_forward(x, params, factor, bias, stride):
    def inorm(v):
        mean = v.mean(axis=(2, 3), keepdims=True)
        var = ((v - mean) ** 2).mean(axis=(2, 3), keepdims=True)
        return (v - mean) / jnp.sqrt(var + EPS)

    def conv(v, w_hwio, b, s, pad):
        out = jax.lax.conv_general_dilated(
            v, w_hwio, window_strides=(s, s),
            padding=[(pad, pad), (pad, pad)],
            dimension_numbers=("NCHW", "HWIO", "NCHW"))
        return out + b.reshape(1, -1, 1, 1)

    planes = params["b1"].shape[0]
    Cin = x.shape[1]
    h1 = jax.nn.relu(inorm(x) * factor[0] + bias[0])
    out1 = conv(h1, params["w1"], params["b1"], 1, 1)
    h2 = jax.nn.relu(inorm(out1) * factor[1] + bias[1])
    out2 = conv(h2, params["w2"], params["b2"], stride, 1)
    if stride != 1 or Cin != planes:
        sc = conv(x, params["ws"], params["bs"], stride, 0)
    else:
        sc = x
    return out2 + sc


if __name__ == "__main__":
    key = jax.random.PRNGKey(0)
    ks = jax.random.split(key, 10)
    N, in_planes, planes, H, W, stride = 2, 4, 8, 16, 16, 2

    x = jax.random.normal(ks[0], (N, in_planes, H, W), jnp.float32)
    factor = (jax.random.normal(ks[1], (N, in_planes, 1, 1), jnp.float32),
              jax.random.normal(ks[2], (N, planes, 1, 1), jnp.float32))
    film_bias = (jax.random.normal(ks[3], (N, in_planes, 1, 1), jnp.float32),
                 jax.random.normal(ks[4], (N, planes, 1, 1), jnp.float32))

    # Deterministic synthetic parameters (HWIO conv weight layout).
    params = {
        "w1": 0.1 * jax.random.normal(ks[5], (3, 3, in_planes, planes), jnp.float32),
        "b1": 0.1 * jax.random.normal(ks[6], (planes,), jnp.float32),
        "w2": 0.1 * jax.random.normal(ks[7], (3, 3, planes, planes), jnp.float32),
        "b2": 0.1 * jax.random.normal(ks[8], (planes,), jnp.float32),
        "ws": 0.1 * jax.random.normal(ks[9], (1, 1, in_planes, planes), jnp.float32),
        "bs": jnp.zeros((planes,), jnp.float32),
    }

    out = wide_basic_forward(x, params, factor, film_bias, stride)
    out = jax.block_until_ready(out)

    ref = reference_forward(x, params, factor, film_bias, stride)
    assert out.shape == ref.shape == (N, planes, H // stride, W // stride)
    # bf16 MXU operands and the bf16 out1 activation set the error floor; 3e-2
    # still catches any tap-ordering / indexing bug (those show O(1) errors).
    err = float(jnp.max(jnp.abs(out - ref)))
    assert jnp.allclose(out, ref, atol=3e-2, rtol=3e-2), err

    print("KERNEL_OK")
</pallas_src>

<mosaic_0001>
module attributes {stable_mosaic.version = 11 : i64} {
  func.func @film_relu_kernel(%arg0: i32, %arg1: i32, %arg2: memref<1x256x4xf32, #tpu.memory_space<vmem>>, %arg3: memref<1x1x4xf32, #tpu.memory_space<vmem>>, %arg4: memref<1x1x4xf32, #tpu.memory_space<vmem>>, %arg5: memref<1x256x4xbf16, #tpu.memory_space<vmem>>) attributes {dimension_semantics = [#tpu.dimension_semantics<parallel>, #tpu.dimension_semantics<parallel>], iteration_bounds = array<i64: 2, 1>, scalar_prefetch = 0 : i64, scratch_operands = 0 : i64, tpu.core_type = #tpu.core_type<tc>, window_params = [{transform_indices = @transform_0, window_bounds = array<i64: 1, 256, 4>}, {transform_indices = @transform_1, window_bounds = array<i64: 1, 1, 4>}, {transform_indices = @transform_2, window_bounds = array<i64: 1, 1, 4>}, {transform_indices = @transform_3, window_bounds = array<i64: 1, 256, 4>}]} {
    %c0 = arith.constant 0 : index
    %c0_0 = arith.constant 0 : index
    %c0_1 = arith.constant 0 : index
    %0 = vector.load %arg2[%c0, %c0_0, %c0_1] : memref<1x256x4xf32, #tpu.memory_space<vmem>>, vector<1x256x4xf32>
    %cst = arith.constant dense<0.000000e+00> : vector<1x4xf32>
    %1 = vector.multi_reduction <add>, %0, %cst [1] : vector<1x256x4xf32> to vector<1x4xf32>
    %2 = vector.shape_cast %1 : vector<1x4xf32> to vector<1x1x4xf32>
    %cst_2 = arith.constant 2.560000e+02 : f32
    %3 = vector.broadcast %cst_2 : f32 to vector<1x1x4xf32>
    %4 = arith.divf %2, %3 : vector<1x1x4xf32>
    %5 = arith.mulf %0, %0 : vector<1x256x4xf32>
    %cst_3 = arith.constant dense<0.000000e+00> : vector<1x4xf32>
    %6 = vector.multi_reduction <add>, %5, %cst_3 [1] : vector<1x256x4xf32> to vector<1x4xf32>
    %7 = vector.shape_cast %6 : vector<1x4xf32> to vector<1x1x4xf32>
    %cst_4 = arith.constant 2.560000e+02 : f32
    %8 = vector.broadcast %cst_4 : f32 to vector<1x1x4xf32>
    %9 = arith.divf %7, %8 : vector<1x1x4xf32>
    %10 = arith.mulf %4, %4 : vector<1x1x4xf32>
    %11 = arith.subf %9, %10 : vector<1x1x4xf32>
    %cst_5 = arith.constant 0.000000e+00 : f32
    %12 = vector.broadcast %cst_5 : f32 to vector<1x1x4xf32>
    %13 = arith.maximumf %11, %12 : vector<1x1x4xf32>
    %14 = vector.broadcast %4 : vector<1x1x4xf32> to vector<1x256x4xf32>
    %15 = arith.subf %0, %14 : vector<1x256x4xf32>
    %cst_6 = arith.constant 9.99999974E-6 : f32
    %16 = vector.broadcast %cst_6 : f32 to vector<1x1x4xf32>
    %17 = arith.addf %13, %16 : vector<1x1x4xf32>
    %18 = math.rsqrt %17 : vector<1x1x4xf32>
    %19 = vector.broadcast %18 : vector<1x1x4xf32> to vector<1x256x4xf32>
    %20 = arith.mulf %15, %19 : vector<1x256x4xf32>
    %c0_7 = arith.constant 0 : index
    %c0_8 = arith.constant 0 : index
    %c0_9 = arith.constant 0 : index
    %21 = vector.load %arg3[%c0_7, %c0_8, %c0_9] : memref<1x1x4xf32, #tpu.memory_space<vmem>>, vector<1x1x4xf32>
    %22 = vector.broadcast %21 : vector<1x1x4xf32> to vector<1x256x4xf32>
    %23 = arith.mulf %20, %22 : vector<1x256x4xf32>
    %c0_10 = arith.constant 0 : index
    %c0_11 = arith.constant 0 : index
    %c0_12 = arith.constant 0 : index
    %24 = vector.load %arg4[%c0_10, %c0_11, %c0_12] : memref<1x1x4xf32, #tpu.memory_space<vmem>>, vector<1x1x4xf32>
    %25 = vector.broadcast %24 : vector<1x1x4xf32> to vector<1x256x4xf32>
    %26 = arith.addf %23, %25 : vector<1x256x4xf32>
    %cst_13 = arith.constant 0.000000e+00 : f32
    %27 = vector.broadcast %cst_13 : f32 to vector<1x256x4xf32>
    %28 = arith.maximumf %26, %27 : vector<1x256x4xf32>
    %29 = arith.truncf %28 : vector<1x256x4xf32> to vector<1x256x4xbf16>
    %c0_14 = arith.constant 0 : index
    %c0_15 = arith.constant 0 : index
    %c0_16 = arith.constant 0 : index
    %30 = vector.load %arg5[%c0_14, %c0_15, %c0_16] : memref<1x256x4xbf16, #tpu.memory_space<vmem>>, vector<1x256x4xbf16>
    tpu.vector_store %arg5[%c0_14, %c0_15, %c0_16], %29 {strides = array<i32>} : memref<1x256x4xbf16, #tpu.memory_space<vmem>>, vector<1x256x4xbf16>,
    return
  }
  func.func @transform_0(%arg0: i32, %arg1: i32) -> (i32, i32, i32) {
    %c0_i32 = arith.constant 0 : i32
    %c0_i32_0 = arith.constant 0 : i32
    return %arg0, %c0_i32, %arg1 : i32, i32, i32
  }
  func.func @transform_1(%arg0: i32, %arg1: i32) -> (i32, i32, i32) {
    %c0_i32 = arith.constant 0 : i32
    %c0_i32_0 = arith.constant 0 : i32
    return %arg0, %c0_i32, %arg1 : i32, i32, i32
  }
  func.func @transform_2(%arg0: i32, %arg1: i32) -> (i32, i32, i32) {
    %c0_i32 = arith.constant 0 : i32
    %c0_i32_0 = arith.constant 0 : i32
    return %arg0, %c0_i32, %arg1 : i32, i32, i32
  }
  func.func @transform_3(%arg0: i32, %arg1: i32) -> (i32, i32, i32) {
    %c0_i32 = arith.constant 0 : i32
    %c0_i32_0 = arith.constant 0 : i32
    return %arg0, %c0_i32, %arg1 : i32, i32, i32
  }
}

</mosaic_0001>

<llo_original>
// kernel: tpu_custom_call.1
$region0: #{tpu_custom_call.1}
  #allocation0 [shape = 'u32[]', space=smem, size = 0x4, offset = 0x4, fixed_abs, tag = 'smem constant byte address 0x4 - core index']
  #allocation1 [shape = 'u32[72,128]{1,0:T(1,128)}', space=vmem, size = 0x9000, scoped, tag = 'internal scratch']
  %s0 = inlined_call_operand.vmem [shape: f32[2,256,4], index: 0, kind: input, shape index: {}]
  %s1 = inlined_call_operand.vmem [shape: f32[2,1,4], index: 1, kind: input, shape index: {}]
  %s2 = inlined_call_operand.vmem [shape: f32[2,1,4], index: 2, kind: input, shape index: {}]
  %s3 = inlined_call_operand.vmem [shape: bf16[2,256,4], index: 3, kind: output, shape index: {}]
  %s4 = sld [smem:[#allocation0]]
  $region45: #{tpu_custom_call.1} parent=0
    _
  %s6 = ssub.s32 1, %s4
  %s7 = scalar_select 0, %s6, %s4
  loop: start=0, step=1, limit=4
  $region2: #{tpu_custom_call.1} parent=0 // loop_pre_header
    _
  $region3: #{tpu_custom_call.1} parent=0 // loop_header
    %s9 = sphi 0, %s13
    %p10 = scmp.ge.s32.totalorder %s9, 4
    %s16 = sphi 0, %s28
    %s17 = sphi 0, %s24
    %s18 = sphi 0, %s16
    %s19 = sphi 0, %s17
    %s20 = sphi 0, %s18
    %s21 = sphi 0, %s19
    %s33 = sphi 0, %s35
    %s36 = sphi 0, %s33
    %s37 = sphi 0, %s36
    %s53 = sphi 0, %s37
    %s61 = sphi 0, %s63
    %s64 = sphi 0, %s61
    %s65 = sphi 0, %s64
    %s81 = sphi 0, %s65
    %s89 = sphi 0, %s91
    %s92 = sphi 0, %s89
    %s93 = sphi 0, %s92
    %s109 = sphi 0, %s93
    %s117 = sphi 0, %s119
    %s120 = sphi 0, %s117
    %s121 = sphi 0, %s120
    %s137 = sphi 0, %s121
  $region4: #{tpu_custom_call.1} parent=0 // loop_header_branch
    %12 = sbr.rel (%p10) target = $region8
  $region5: #{tpu_custom_call.1} parent=0 // loop_body
    %s14 = ssub.s32 %s9, 1
    %s15 = ssub.s32 %s9, 2
    %s22 = sadd.s32 1, %s17
    %p23 = scmp.ge.s32.totalorder %s22, 1
    %s24 = scalar_select %p23, 0, %s22
    %s25 = sadd.s32 1, %s16
    %s26 = scalar_select %p23, %s25, %s16
    %p27 = scmp.ge.s32.totalorder %s26, 2
    %s28 = scalar_select %p27, 0, %s26
    %s29 = ssub.s32 %s16, %s28
    %s30 = ssub.s32 %s17, %s24
    %s31 = sor.u32 %s29, %s30
    %p32 = scmp.eq.s32.totalorder %s31, 0
    %s34 = sadd.s32 %s33, 1
    %s35 = scalar_select %p32, %s33, %s34
    %p38 = pneg %p32
    %p39 = scmp.eq.s32.totalorder %s9, 1
    %p40 = por %p38, %p39
    %p41 = scmp.ne.s32.totalorder %s33, %s36
    %p42 = scmp.eq.s32.totalorder %s9, 0
    %p43 = por %p41, %p42
    %p44 = scmp.ne.s32.totalorder %s33, %s36
    %p45 = scmp.eq.s32.totalorder %s14, 1
    %p46 = por %p44, %p45
    %p47 = scmp.ne.s32.totalorder %s36, %s37
    %p48 = scmp.eq.s32.totalorder %s14, 0
    %p49 = por %p47, %p48
    %p50 = scmp.ne.s32.totalorder %s36, %s37
    %p51 = scmp.eq.s32.totalorder %s15, 1
    %p52 = por %p50, %p51
    %p54 = scmp.ne.s32.totalorder %s37, %s53
    %p55 = scmp.eq.s32.totalorder %s15, 0
    %p56 = por %p54, %p55
    %s57 = ssub.s32 %s16, %s28
    %s58 = ssub.s32 %s17, %s24
    %s59 = sor.u32 %s57, %s58
    %p60 = scmp.eq.s32.totalorder %s59, 0
    %s62 = sadd.s32 %s61, 1
    %s63 = scalar_select %p60, %s61, %s62
    %p66 = pneg %p60
    %p67 = scmp.eq.s32.totalorder %s9, 1
    %p68 = por %p66, %p67
    %p69 = scmp.ne.s32.totalorder %s61, %s64
    %p70 = scmp.eq.s32.totalorder %s9, 0
    %p71 = por %p69, %p70
    %p72 = scmp.ne.s32.totalorder %s61, %s64
    %p73 = scmp.eq.s32.totalorder %s14, 1
    %p74 = por %p72, %p73
    %p75 = scmp.ne.s32.totalorder %s64, %s65
    %p76 = scmp.eq.s32.totalorder %s14, 0
    %p77 = por %p75, %p76
    %p78 = scmp.ne.s32.totalorder %s64, %s65
    %p79 = scmp.eq.s32.totalorder %s15, 1
    %p80 = por %p78, %p79
    %p82 = scmp.ne.s32.totalorder %s65, %s81
    %p83 = scmp.eq.s32.totalorder %s15, 0
    %p84 = por %p82, %p83
    %s85 = ssub.s32 %s16, %s28
    %s86 = ssub.s32 %s17, %s24
    %s87 = sor.u32 %s85, %s86
    %p88 = scmp.eq.s32.totalorder %s87, 0
    %s90 = sadd.s32 %s89, 1
    %s91 = scalar_select %p88, %s89, %s90
    %p94 = pneg %p88
    %p95 = scmp.eq.s32.totalorder %s9, 1
    %p96 = por %p94, %p95
    %p97 = scmp.ne.s32.totalorder %s89, %s92
    %p98 = scmp.eq.s32.totalorder %s9, 0
    %p99 = por %p97, %p98
    %p100 = scmp.ne.s32.totalorder %s89, %s92
    %p101 = scmp.eq.s32.totalorder %s14, 1
    %p102 = por %p100, %p101
    %p103 = scmp.ne.s32.totalorder %s92, %s93
    %p104 = scmp.eq.s32.totalorder %s14, 0
    %p105 = por %p103, %p104
    %p106 = scmp.ne.s32.totalorder %s92, %s93
    %p107 = scmp.eq.s32.totalorder %s15, 1
    %p108 = por %p106, %p107
    %p110 = scmp.ne.s32.totalorder %s93, %s109
    %p111 = scmp.eq.s32.totalorder %s15, 0
    %p112 = por %p110, %p111
    %s113 = ssub.s32 %s16, %s28
    %s114 = ssub.s32 %s17, %s24
    %s115 = sor.u32 %s113, %s114
    %p116 = scmp.eq.s32.totalorder %s115, 0
    %s118 = sadd.s32 %s117, 1
    %s119 = scalar_select %p116, %s117, %s118
    %p122 = pneg %p116
    %p123 = scmp.eq.s32.totalorder %s9, 1
    %p124 = por %p122, %p123
    %p125 = scmp.ne.s32.totalorder %s117, %s120
    %p126 = scmp.eq.s32.totalorder %s9, 0
    %p127 = por %p125, %p126
    %p128 = scmp.ne.s32.totalorder %s117, %s120
    %p129 = scmp.eq.s32.totalorder %s14, 1
    %p130 = por %p128, %p129
    %p131 = scmp.ne.s32.totalorder %s120, %s121
    %p132 = scmp.eq.s32.totalorder %s14, 0
    %p133 = por %p131, %p132
    %p134 = scmp.ne.s32.totalorder %s120, %s121
    %p135 = scmp.eq.s32.totalorder %s15, 1
    %p136 = por %p134, %p135
    %p138 = scmp.ne.s32.totalorder %s121, %s137
    %p139 = scmp.eq.s32.totalorder %s15, 0
    %p140 = por %p138, %p139
    %p141 = scmp.le.s32.totalorder 1, %s9
    %p142 = scmp.lt.s32.totalorder %s9, 3
    %p143 = pnand %p141, %p142
    %p144 = pneg %p143
    // Predicated region
    $region9: #{tpu_custom_call.1} parent=5 // pred_check
      _
    $region10: #{tpu_custom_call.1} parent=5 // pred_check_branch
      %146 = sbr.rel (%p143) target = $region12
    $region11: #{tpu_custom_call.1} parent=5 // pred_region
      %s147 = ssub.s32 %s9, 1
    $region12: #{tpu_custom_call.1} parent=5 // pred_fallthru
      _
    %p148 = scmp.lt.s32.totalorder %s9, 2
    // Predicated region
    $region13: #{tpu_custom_call.1} parent=5 // pred_check
      %p149 = pneg %p148
    $region14: #{tpu_custom_call.1} parent=5 // pred_check_branch
      %151 = sbr.rel (%p149) target = $region16
    $region15: #{tpu_custom_call.1} parent=5 // pred_region
      // Predicated region
      $region17: #{tpu_custom_call.1} parent=15 // pred_check
        %p152 = pneg %p43
      $region18: #{tpu_custom_call.1} parent=15 // pred_check_branch
        %154 = sbr.rel (%p152) target = $region20
      $region19: #{tpu_custom_call.1} parent=15 // pred_region
        %p155 = scmp.lt.s32.totalorder %s16, 1
        %s156 = scalar_select %p155, %s16, 1
        %p157 = scmp.lt.s32.totalorder %s17, 0
        %s158 = scalar_select %p157, %s17, 0
        %s159 = smul.addr %s156, 32
        %s160 = sadd.s32 %s158, %s159
        %s161 = smul.addr %s160, 8
        %s162 = scalar_lea.vmem %s0, %s161
      $region20: #{tpu_custom_call.1} parent=15 // pred_fallthru
        _
      // Predicated region
      $region21: #{tpu_custom_call.1} parent=15 // pred_check
        %p163 = pneg %p71
      $region22: #{tpu_custom_call.1} parent=15 // pred_check_branch
        %165 = sbr.rel (%p163) target = $region24
      $region23: #{tpu_custom_call.1} parent=15 // pred_region
        %p166 = scmp.lt.s32.totalorder %s16, 1
        %s167 = scalar_select %p166, %s16, 1
        %p168 = scmp.lt.s32.totalorder %s17, 0
        %s169 = scalar_select %p168, %s17, 0
        %s170 = sadd.s32 %s169, %s167
        %s171 = scalar_lea.vmem %s1, %s170
      $region24: #{tpu_custom_call.1} parent=15 // pred_fallthru
        _
      // Predicated region
      $region25: #{tpu_custom_call.1} parent=15 // pred_check
        %p172 = pneg %p99
      $region26: #{tpu_custom_call.1} parent=15 // pred_check_branch
        %174 = sbr.rel (%p172) target = $region28
      $region27: #{tpu_custom_call.1} parent=15 // pred_region
        %p175 = scmp.lt.s32.totalorder %s16, 1
        %s176 = scalar_select %p175, %s16, 1
        %p177 = scmp.lt.s32.totalorder %s17, 0
        %s178 = scalar_select %p177, %s17, 0
        %s179 = sadd.s32 %s178, %s176
        %s180 = scalar_lea.vmem %s2, %s179
      $region28: #{tpu_custom_call.1} parent=15 // pred_fallthru
        _
    $region16: #{tpu_custom_call.1} parent=5 // pred_fallthru
      _
    %p181 = scmp.le.s32.totalorder 1, %s9
    %p182 = scmp.lt.s32.totalorder %s9, 3
    %p183 = pnand %p181, %p182
    %p184 = pneg %p183
    // Predicated region
    $region29: #{tpu_custom_call.1} parent=5 // pred_check
      _
    $region30: #{tpu_custom_call.1} parent=5 // pred_check_branch
      %186 = sbr.rel (%p183) target = $region32
    $region31: #{tpu_custom_call.1} parent=5 // pred_region
      %s187 = ssub.s32 %s9, 1
      %p188 = scmp.lt.s32.totalorder %s18, 1
      %s189 = scalar_select %p188, %s18, 1
      %p190 = scmp.lt.s32.totalorder %s19, 0
      %s191 = scalar_select %p190, %s19, 0
      %s192 = smul.addr %s189, 32
      %s193 = sadd.s32 %s191, %s192
      %s194 = smul.addr %s193, 8
      %s195 = scalar_lea.vmem %s0, %s194
      %p196 = pneg %p49
      %p197 = pneg %p46
      %p198 = scmp.lt.s32.totalorder %s18, 1
      %s199 = scalar_select %p198, %s18, 1
      %p200 = scmp.lt.s32.totalorder %s19, 0
      %s201 = scalar_select %p200, %s19, 0
      %s202 = sadd.s32 %s201, %s199
      %s203 = scalar_lea.vmem %s1, %s202
      %p204 = pneg %p77
      %p205 = pneg %p74
      %p206 = scmp.lt.s32.totalorder %s18, 1
      %s207 = scalar_select %p206, %s18, 1
      %p208 = scmp.lt.s32.totalorder %s19, 0
      %s209 = scalar_select %p208, %s19, 0
      %s210 = sadd.s32 %s209, %s207
      %s211 = scalar_lea.vmem %s2, %s210
      %p212 = pneg %p105
      %p213 = pneg %p102
      %p214 = pneg %p133
      %p215 = pneg %p130
      %p216 = scmp.lt.s32.totalorder %s18, 1
      %s217 = scalar_select %p216, %s18, 1
      %p218 = scmp.lt.s32.totalorder %s19, 0
      %s219 = scalar_select %p218, %s19, 0
      %s220 = smul.addr %s217, 32
      %s221 = sadd.s32 %s219, %s220
      %s222 = smul.addr %s221, 4
      %s223 = scalar_lea.vmem %s3, %s222
      %p224 = scmp.lt.s32.totalorder %s18, 1
      %s225 = scalar_select %p224, %s18, 1
      %p226 = scmp.lt.s32.totalorder %s19, 0
      %s227 = scalar_select %p226, %s19, 0
      %s228 = smul.addr %s225, 32
      %s229 = sadd.s32 %s227, %s228
      %s230 = smul.addr %s229, 8
      %s231 = scalar_lea.vmem %s0, %s230
      %p232 = scmp.lt.s32.totalorder %s18, 1
      %s233 = scalar_select %p232, %s18, 1
      %p234 = scmp.lt.s32.totalorder %s19, 0
      %s235 = scalar_select %p234, %s19, 0
      %s236 = sadd.s32 %s235, %s233
      %s237 = scalar_lea.vmem %s1, %s236
      %p238 = scmp.lt.s32.totalorder %s18, 1
      %s239 = scalar_select %p238, %s18, 1
      %p240 = scmp.lt.s32.totalorder %s19, 0
      %s241 = scalar_select %p240, %s19, 0
      %s242 = sadd.s32 %s241, %s239
      %s243 = scalar_lea.vmem %s2, %s242
      %p244 = scmp.lt.s32.totalorder %s18, 1
      %s245 = scalar_select %p244, %s18, 1
      %p246 = scmp.lt.s32.totalorder %s19, 0
      %s247 = scalar_select %p246, %s19, 0
      %s248 = smul.addr %s245, 32
      %s249 = sadd.s32 %s247, %s248
      %s250 = smul.addr %s249, 4
      %s251 = scalar_lea.vmem %s3, %s250
      %v252 = vld [vmem:[%s231] sm:$0xff]
      %v253 = vld [vmem:[%s231 + $0x8] sm:$0xff]
      %v254 = vld [vmem:[%s231 + $0x10] sm:$0xff]
      %v255 = vld [vmem:[%s231 + $0x18] sm:$0xff]
      %v256 = vld [vmem:[%s231 + $0x20] sm:$0xff]
      %v257 = vld [vmem:[%s231 + $0x28] sm:$0xff]
      %v258 = vld [vmem:[%s231 + $0x30] sm:$0xff]
      %v259 = vld [vmem:[%s231 + $0x38] sm:$0xff]
      %v260 = vld [vmem:[%s231 + $0x40] sm:$0xff]
      %v261 = vld [vmem:[%s231 + $0x48] sm:$0xff]
      %v262 = vld [vmem:[%s231 + $0x50] sm:$0xff]
      %v263 = vld [vmem:[%s231 + $0x58] sm:$0xff]
      %v264 = vld [vmem:[%s231 + $0x60] sm:$0xff]
      %v265 = vld [vmem:[%s231 + $0x68] sm:$0xff]
      %v266 = vld [vmem:[%s231 + $0x70] sm:$0xff]
      %v267 = vld [vmem:[%s231 + $0x78] sm:$0xff]
      %v268 = vld [vmem:[%s231 + $0x80] sm:$0xff]
      %v269 = vld [vmem:[%s231 + $0x88] sm:$0xff]
      %v270 = vld [vmem:[%s231 + $0x90] sm:$0xff]
      %v271 = vld [vmem:[%s231 + $0x98] sm:$0xff]
      %v272 = vld [vmem:[%s231 + $0xa0] sm:$0xff]
      %v273 = vld [vmem:[%s231 + $0xa8] sm:$0xff]
      %v274 = vld [vmem:[%s231 + $0xb0] sm:$0xff]
      %v275 = vld [vmem:[%s231 + $0xb8] sm:$0xff]
      %v276 = vld [vmem:[%s231 + $0xc0] sm:$0xff]
      %v277 = vld [vmem:[%s231 + $0xc8] sm:$0xff]
      %v278 = vld [vmem:[%s231 + $0xd0] sm:$0xff]
      %v279 = vld [vmem:[%s231 + $0xd8] sm:$0xff]
      %v280 = vld [vmem:[%s231 + $0xe0] sm:$0xff]
      %v281 = vld [vmem:[%s231 + $0xe8] sm:$0xff]
      %v282 = vld [vmem:[%s231 + $0xf0] sm:$0xff]
      %v283 = vld [vmem:[%s231 + $0xf8] sm:$0xff]
      %vm284 = vcmask 31744
      %v285 = vsel %vm284, %v252, 0.0
      %v286 = vsel %vm284, %v253, 0.0
      %v287 = vadd.f32 %v285, %v286
      %v288 = vsel %vm284, %v254, 0.0
      %v289 = vadd.f32 %v287, %v288
      %v290 = vsel %vm284, %v255, 0.0
      %v291 = vadd.f32 %v289, %v290
      %v292 = vsel %vm284, %v256, 0.0
      %v293 = vadd.f32 %v291, %v292
      %v294 = vsel %vm284, %v257, 0.0
      %v295 = vadd.f32 %v293, %v294
      %v296 = vsel %vm284, %v258, 0.0
      %v297 = vadd.f32 %v295, %v296
      %v298 = vsel %vm284, %v259, 0.0
      %v299 = vadd.f32 %v297, %v298
      %v300 = vsel %vm284, %v260, 0.0
      %v301 = vadd.f32 %v299, %v300
      %v302 = vsel %vm284, %v261, 0.0
      %v303 = vadd.f32 %v301, %v302
      %v304 = vsel %vm284, %v262, 0.0
      %v305 = vadd.f32 %v303, %v304
      %v306 = vsel %vm284, %v263, 0.0
      %v307 = vadd.f32 %v305, %v306
      %v308 = vsel %vm284, %v264, 0.0
      %v309 = vadd.f32 %v307, %v308
      %v310 = vsel %vm284, %v265, 0.0
      %v311 = vadd.f32 %v309, %v310
      %v312 = vsel %vm284, %v266, 0.0
      %v313 = vadd.f32 %v311, %v312
      %v314 = vsel %vm284, %v267, 0.0
      %v315 = vadd.f32 %v313, %v314
      %v316 = vsel %vm284, %v268, 0.0
      %v317 = vadd.f32 %v315, %v316
      %v318 = vsel %vm284, %v269, 0.0
      %v319 = vadd.f32 %v317, %v318
      %v320 = vsel %vm284, %v270, 0.0
      %v321 = vadd.f32 %v319, %v320
      %v322 = vsel %vm284, %v271, 0.0
      %v323 = vadd.f32 %v321, %v322
      %v324 = vsel %vm284, %v272, 0.0
      %v325 = vadd.f32 %v323, %v324
      %v326 = vsel %vm284, %v273, 0.0
      %v327 = vadd.f32 %v325, %v326
      %v328 = vsel %vm284, %v274, 0.0
      %v329 = vadd.f32 %v327, %v328
      %v330 = vsel %vm284, %v275, 0.0
      %v331 = vadd.f32 %v329, %v330
      %v332 = vsel %vm284, %v276, 0.0
      %v333 = vadd.f32 %v331, %v332
      %v334 = vsel %vm284, %v277, 0.0
      %v335 = vadd.f32 %v333, %v334
      %v336 = vsel %vm284, %v278, 0.0
      %v337 = vadd.f32 %v335, %v336
      %v338 = vsel %vm284, %v279, 0.0
      %v339 = vadd.f32 %v337, %v338
      %v340 = vsel %vm284, %v280, 0.0
      %v341 = vadd.f32 %v339, %v340
      %v342 = vsel %vm284, %v281, 0.0
      %v343 = vadd.f32 %v341, %v342
      %v344 = vsel %vm284, %v282, 0.0
      %v345 = vadd.f32 %v343, %v344
      %v346 = vsel %vm284, %v283, 0.0
      %v347 = vadd.f32 %v345, %v346
      %v348 = vrot.slane %v347, 4
      %v349 = vadd.f32 %v347, %v348
      %v350 = vrot.slane %v349, 2
      %v351 = vadd.f32 %v349, %v350
      %v352 = vrot.slane %v351, 1
      %v353 = vadd.f32 %v351, %v352
      %v354 = vrcp.pop 256.0
      %v355 = vmul.f32 256.0, %v354
      %v356 = vsub.f32 1.0, %v355
      %v357 = vmul.f32 %v354, %v356
      %v358 = vadd.f32 %v354, %v357
      %vm359 = vweird.f32 %v354
      %v360 = vsel %vm359, %v354, %v358
      %v361 = vmul.f32 %v353, %v360
      %v362 = vmul.f32 %v252, %v252
      %v363 = vmul.f32 %v253, %v253
      %v364 = vmul.f32 %v254, %v254
      %v365 = vmul.f32 %v255, %v255
      %v366 = vmul.f32 %v256, %v256
      %v367 = vmul.f32 %v257, %v257
      %v368 = vmul.f32 %v258, %v258
      %v369 = vmul.f32 %v259, %v259
      %v370 = vmul.f32 %v260, %v260
      %v371 = vmul.f32 %v261, %v261
      %v372 = vmul.f32 %v262, %v262
      %v373 = vmul.f32 %v263, %v263
      %v374 = vmul.f32 %v264, %v264
      %v375 = vmul.f32 %v265, %v265
      %v376 = vmul.f32 %v266, %v266
      %v377 = vmul.f32 %v267, %v267
      %v378 = vmul.f32 %v268, %v268
      %v379 = vmul.f32 %v269, %v269
      %v380 = vmul.f32 %v270, %v270
      %v381 = vmul.f32 %v271, %v271
      %v382 = vmul.f32 %v272, %v272
      %v383 = vmul.f32 %v273, %v273
      %v384 = vmul.f32 %v274, %v274
      %v385 = vmul.f32 %v275, %v275
      %v386 = vmul.f32 %v276, %v276
      %v387 = vmul.f32 %v277, %v277
      %v388 = vmul.f32 %v278, %v278
      %v389 = vmul.f32 %v279, %v279
      %v390 = vmul.f32 %v280, %v280
      %v391 = vmul.f32 %v281, %v281
      %v392 = vmul.f32 %v282, %v282
      %v393 = vmul.f32 %v283, %v283
      %v394 = vsel %vm284, %v362, 0.0
      %v395 = vsel %vm284, %v363, 0.0
      %v396 = vadd.f32 %v394, %v395
      %v397 = vsel %vm284, %v364, 0.0
      %v398 = vadd.f32 %v396, %v397
      %v399 = vsel %vm284, %v365, 0.0
      %v400 = vadd.f32 %v398, %v399
      %v401 = vsel %vm284, %v366, 0.0
      %v402 = vadd.f32 %v400, %v401
      %v403 = vsel %vm284, %v367, 0.0
      %v404 = vadd.f32 %v402, %v403
      %v405 = vsel %vm284, %v368, 0.0
      %v406 = vadd.f32 %v404, %v405
      %v407 = vsel %vm284, %v369, 0.0
      %v408 = vadd.f32 %v406, %v407
      %v409 = vsel %vm284, %v370, 0.0
      %v410 = vadd.f32 %v408, %v409
      %v411 = vsel %vm284, %v371, 0.0
      %v412 = vadd.f32 %v410, %v411
      %v413 = vsel %vm284, %v372, 0.0
      %v414 = vadd.f32 %v412, %v413
      %v415 = vsel %vm284, %v373, 0.0
      %v416 = vadd.f32 %v414, %v415
      %v417 = vsel %vm284, %v374, 0.0
      %v418 = vadd.f32 %v416, %v417
      %v419 = vsel %vm284, %v375, 0.0
      %v420 = vadd.f32 %v418, %v419
      %v421 = vsel %vm284, %v376, 0.0
      %v422 = vadd.f32 %v420, %v421
      %v423 = vsel %vm284, %v377, 0.0
      %v424 = vadd.f32 %v422, %v423
      %v425 = vsel %vm284, %v378, 0.0
      %v426 = vadd.f32 %v424, %v425
      %v427 = vsel %vm284, %v379, 0.0
      %v428 = vadd.f32 %v426, %v427
      %v429 = vsel %vm284, %v380, 0.0
      %v430 = vadd.f32 %v428, %v429
      %v431 = vsel %vm284, %v381, 0.0
      %v432 = vadd.f32 %v430, %v431
      %v433 = vsel %vm284, %v382, 0.0
      %v434 = vadd.f32 %v432, %v433
      %v435 = vsel %vm284, %v383, 0.0
      %v436 = vadd.f32 %v434, %v435
      %v437 = vsel %vm284, %v384, 0.0
      %v438 = vadd.f32 %v436, %v437
      %v439 = vsel %vm284, %v385, 0.0
      %v440 = vadd.f32 %v438, %v439
      %v441 = vsel %vm284, %v386, 0.0
      %v442 = vadd.f32 %v440, %v441
      %v443 = vsel %vm284, %v387, 0.0
      %v444 = vadd.f32 %v442, %v443
      %v445 = vsel %vm284, %v388, 0.0
      %v446 = vadd.f32 %v444, %v445
      %v447 = vsel %vm284, %v389, 0.0
      %v448 = vadd.f32 %v446, %v447
      %v449 = vsel %vm284, %v390, 0.0
      %v450 = vadd.f32 %v448, %v449
      %v451 = vsel %vm284, %v391, 0.0
      %v452 = vadd.f32 %v450, %v451
      %v453 = vsel %vm284, %v392, 0.0
      %v454 = vadd.f32 %v452, %v453
      %v455 = vsel %vm284, %v393, 0.0
      %v456 = vadd.f32 %v454, %v455
      %v457 = vrot.slane %v456, 4
      %v458 = vadd.f32 %v456, %v457
      %v459 = vrot.slane %v458, 2
      %v460 = vadd.f32 %v458, %v459
      %v461 = vrot.slane %v460, 1
      %v462 = vadd.f32 %v460, %v461
      %v463 = vmul.f32 %v462, %v360
      %v464 = vmul.f32 %v361, %v361
      %v465 = vsub.f32 %v463, %v464
      %v466 = vmax.f32 %v465, 0.0
      %v467 = vsub.f32 %v252, %v361
      %v468 = vsub.f32 %v253, %v361
      %v469 = vsub.f32 %v254, %v361
      %v470 = vsub.f32 %v255, %v361
      %v471 = vsub.f32 %v256, %v361
      %v472 = vsub.f32 %v257, %v361
      %v473 = vsub.f32 %v258, %v361
      %v474 = vsub.f32 %v259, %v361
      %v475 = vsub.f32 %v260, %v361
      %v476 = vsub.f32 %v261, %v361
      %v477 = vsub.f32 %v262, %v361
      %v478 = vsub.f32 %v263, %v361
      %v479 = vsub.f32 %v264, %v361
      %v480 = vsub.f32 %v265, %v361
      %v481 = vsub.f32 %v266, %v361
      %v482 = vsub.f32 %v267, %v361
      %v483 = vsub.f32 %v268, %v361
      %v484 = vsub.f32 %v269, %v361
      %v485 = vsub.f32 %v270, %v361
      %v486 = vsub.f32 %v271, %v361
      %v487 = vsub.f32 %v272, %v361
      %v488 = vsub.f32 %v273, %v361
      %v489 = vsub.f32 %v274, %v361
      %v490 = vsub.f32 %v275, %v361
      %v491 = vsub.f32 %v276, %v361
      %v492 = vsub.f32 %v277, %v361
      %v493 = vsub.f32 %v278, %v361
      %v494 = vsub.f32 %v279, %v361
      %v495 = vsub.f32 %v280, %v361
      %v496 = vsub.f32 %v281, %v361
      %v497 = vsub.f32 %v282, %v361
      %v498 = vsub.f32 %v283, %v361
      %v499 = vadd.f32 %v466, 1e-05
      %v500 = vrsqrt.pop %v499
      %v501 = vmul.f32 %v500, %v499
      %v502 = vmul.f32 %v501, %v500
      %v503 = vmul.f32 0.5, %v502
      %v504 = vsub.f32 1.5, %v503
      %v505 = vmul.f32 %v500, %v504
      %vm506 = vweird.f32 %v499
      %vm507 = vweird.f32 %v500
      %vm508 = vmor %vm506, %vm507
      %v509 = vsel %vm508, %v500, %v505
      %v510 = vmul.f32 %v467, %v509
      %v511 = vmul.f32 %v468, %v509
      %v512 = vmul.f32 %v469, %v509
      %v513 = vmul.f32 %v470, %v509
      %v514 = vmul.f32 %v471, %v509
      %v515 = vmul.f32 %v472, %v509
      %v516 = vmul.f32 %v473, %v509
      %v517 = vmul.f32 %v474, %v509
      %v518 = vmul.f32 %v475, %v509
      %v519 = vmul.f32 %v476, %v509
      %v520 = vmul.f32 %v477, %v509
      %v521 = vmul.f32 %v478, %v509
      %v522 = vmul.f32 %v479, %v509
      %v523 = vmul.f32 %v480, %v509
      %v524 = vmul.f32 %v481, %v509
      %v525 = vmul.f32 %v482, %v509
      %v526 = vmul.f32 %v483, %v509
      %v527 = vmul.f32 %v484, %v509
      %v528 = vmul.f32 %v485, %v509
      %v529 = vmul.f32 %v486, %v509
      %v530 = vmul.f32 %v487, %v509
      %v531 = vmul.f32 %v488, %v509
      %v532 = vmul.f32 %v489, %v509
      %v533 = vmul.f32 %v490, %v509
      %v534 = vmul.f32 %v491, %v509
      %v535 = vmul.f32 %v492, %v509
      %v536 = vmul.f32 %v493, %v509
      %v537 = vmul.f32 %v494, %v509
      %v538 = vmul.f32 %v495, %v509
      %v539 = vmul.f32 %v496, %v509
      %v540 = vmul.f32 %v497, %v509
      %v541 = vmul.f32 %v498, %v509
      %v542 = vld [vmem:[%s237] sm:$0x1]
      %v544 = vperm.slane %v542, 0
      %v546 = vmul.f32 %v510, %v544
      %v547 = vmul.f32 %v511, %v544
      %v548 = vmul.f32 %v512, %v544
      %v549 = vmul.f32 %v513, %v544
      %v550 = vmul.f32 %v514, %v544
      %v551 = vmul.f32 %v515, %v544
      %v552 = vmul.f32 %v516, %v544
      %v553 = vmul.f32 %v517, %v544
      %v554 = vmul.f32 %v518, %v544
      %v555 = vmul.f32 %v519, %v544
      %v556 = vmul.f32 %v520, %v544
      %v557 = vmul.f32 %v521, %v544
      %v558 = vmul.f32 %v522, %v544
      %v559 = vmul.f32 %v523, %v544
      %v560 = vmul.f32 %v524, %v544
      %v561 = vmul.f32 %v525, %v544
      %v562 = vmul.f32 %v526, %v544
      %v563 = vmul.f32 %v527, %v544
      %v564 = vmul.f32 %v528, %v544
      %v565 = vmul.f32 %v529, %v544
      %v566 = vmul.f32 %v530, %v544
      %v567 = vmul.f32 %v531, %v544
      %v568 = vmul.f32 %v532, %v544
      %v569 = vmul.f32 %v533, %v544
      %v570 = vmul.f32 %v534, %v544
      %v571 = vmul.f32 %v535, %v544
      %v572 = vmul.f32 %v536, %v544
      %v573 = vmul.f32 %v537, %v544
      %v574 = vmul.f32 %v538, %v544
      %v575 = vmul.f32 %v539, %v544
      %v576 = vmul.f32 %v540, %v544
      %v577 = vmul.f32 %v541, %v544
      %v578 = vld [vmem:[%s243] sm:$0x1]
      %v580 = vperm.slane %v578, 0
      %v582 = vadd.f32 %v546, %v580
      %v583 = vadd.f32 %v547, %v580
      %v584 = vadd.f32 %v548, %v580
      %v585 = vadd.f32 %v549, %v580
      %v586 = vadd.f32 %v550, %v580
      %v587 = vadd.f32 %v551, %v580
      %v588 = vadd.f32 %v552, %v580
      %v589 = vadd.f32 %v553, %v580
      %v590 = vadd.f32 %v554, %v580
      %v591 = vadd.f32 %v555, %v580
      %v592 = vadd.f32 %v556, %v580
      %v593 = vadd.f32 %v557, %v580
      %v594 = vadd.f32 %v558, %v580
      %v595 = vadd.f32 %v559, %v580
      %v596 = vadd.f32 %v560, %v580
      %v597 = vadd.f32 %v561, %v580
      %v598 = vadd.f32 %v562, %v580
      %v599 = vadd.f32 %v563, %v580
      %v600 = vadd.f32 %v564, %v580
      %v601 = vadd.f32 %v565, %v580
      %v602 = vadd.f32 %v566, %v580
      %v603 = vadd.f32 %v567, %v580
      %v604 = vadd.f32 %v568, %v580
      %v605 = vadd.f32 %v569, %v580
      %v606 = vadd.f32 %v570, %v580
      %v607 = vadd.f32 %v571, %v580
      %v608 = vadd.f32 %v572, %v580
      %v609 = vadd.f32 %v573, %v580
      %v610 = vadd.f32 %v574, %v580
      %v611 = vadd.f32 %v575, %v580
      %v612 = vadd.f32 %v576, %v580
      %v613 = vadd.f32 %v577, %v580
      %v614 = vmax.f32 %v582, 0.0
      %v615 = vmax.f32 %v583, 0.0
      %v616 = vmax.f32 %v584, 0.0
      %v617 = vmax.f32 %v585, 0.0
      %v618 = vmax.f32 %v586, 0.0
      %v619 = vmax.f32 %v587, 0.0
      %v620 = vmax.f32 %v588, 0.0
      %v621 = vmax.f32 %v589, 0.0
      %v622 = vmax.f32 %v590, 0.0
      %v623 = vmax.f32 %v591, 0.0
      %v624 = vmax.f32 %v592, 0.0
      %v625 = vmax.f32 %v593, 0.0
      %v626 = vmax.f32 %v594, 0.0
      %v627 = vmax.f32 %v595, 0.0
      %v628 = vmax.f32 %v596, 0.0
      %v629 = vmax.f32 %v597, 0.0
      %v630 = vmax.f32 %v598, 0.0
      %v631 = vmax.f32 %v599, 0.0
      %v632 = vmax.f32 %v600, 0.0
      %v633 = vmax.f32 %v601, 0.0
      %v634 = vmax.f32 %v602, 0.0
      %v635 = vmax.f32 %v603, 0.0
      %v636 = vmax.f32 %v604, 0.0
      %v637 = vmax.f32 %v605, 0.0
      %v638 = vmax.f32 %v606, 0.0
      %v639 = vmax.f32 %v607, 0.0
      %v640 = vmax.f32 %v608, 0.0
      %v641 = vmax.f32 %v609, 0.0
      %v642 = vmax.f32 %v610, 0.0
      %v643 = vmax.f32 %v611, 0.0
      %v644 = vmax.f32 %v612, 0.0
      %v645 = vmax.f32 %v613, 0.0
      %v646 = vpack.c.bf16 %v614, %v614
      %v647 = vpack.c.bf16 %v615, %v615
      %v648 = vpack.c.bf16 %v616, %v616
      %v649 = vpack.c.bf16 %v617, %v617
      %v650 = vpack.c.bf16 %v618, %v618
      %v651 = vpack.c.bf16 %v619, %v619
      %v652 = vpack.c.bf16 %v620, %v620
      %v653 = vpack.c.bf16 %v621, %v621
      %v654 = vpack.c.bf16 %v622, %v622
      %v655 = vpack.c.bf16 %v623, %v623
      %v656 = vpack.c.bf16 %v624, %v624
      %v657 = vpack.c.bf16 %v625, %v625
      %v658 = vpack.c.bf16 %v626, %v626
      %v659 = vpack.c.bf16 %v627, %v627
      %v660 = vpack.c.bf16 %v628, %v628
      %v661 = vpack.c.bf16 %v629, %v629
      %v662 = vpack.c.bf16 %v630, %v630
      %v663 = vpack.c.bf16 %v631, %v631
      %v664 = vpack.c.bf16 %v632, %v632
      %v665 = vpack.c.bf16 %v633, %v633
      %v666 = vpack.c.bf16 %v634, %v634
      %v667 = vpack.c.bf16 %v635, %v635
      %v668 = vpack.c.bf16 %v636, %v636
      %v669 = vpack.c.bf16 %v637, %v637
      %v670 = vpack.c.bf16 %v638, %v638
      %v671 = vpack.c.bf16 %v639, %v639
      %v672 = vpack.c.bf16 %v640, %v640
      %v673 = vpack.c.bf16 %v641, %v641
      %v674 = vpack.c.bf16 %v642, %v642
      %v675 = vpack.c.bf16 %v643, %v643
      %v676 = vpack.c.bf16 %v644, %v644
      %v677 = vpack.c.bf16 %v645, %v645
      %vm678 = vcmask 27648
      %679 = vst.msk [vmem:[%s251] sm:$0xf] %vm678, %v646
      %680 = vst.msk [vmem:[%s251 + $0x4] sm:$0xf] %vm678, %v647
      %681 = vst.msk [vmem:[%s251 + $0x8] sm:$0xf] %vm678, %v648
      %682 = vst.msk [vmem:[%s251 + $0xc] sm:$0xf] %vm678, %v649
      %683 = vst.msk [vmem:[%s251 + $0x10] sm:$0xf] %vm678, %v650
      %684 = vst.msk [vmem:[%s251 + $0x14] sm:$0xf] %vm678, %v651
      %685 = vst.msk [vmem:[%s251 + $0x18] sm:$0xf] %vm678, %v652
      %686 = vst.msk [vmem:[%s251 + $0x1c] sm:$0xf] %vm678, %v653
      %687 = vst.msk [vmem:[%s251 + $0x20] sm:$0xf] %vm678, %v654
      %688 = vst.msk [vmem:[%s251 + $0x24] sm:$0xf] %vm678, %v655
      %689 = vst.msk [vmem:[%s251 + $0x28] sm:$0xf] %vm678, %v656
      %690 = vst.msk [vmem:[%s251 + $0x2c] sm:$0xf] %vm678, %v657
      %691 = vst.msk [vmem:[%s251 + $0x30] sm:$0xf] %vm678, %v658
      %692 = vst.msk [vmem:[%s251 + $0x34] sm:$0xf] %vm678, %v659
      %693 = vst.msk [vmem:[%s251 + $0x38] sm:$0xf] %vm678, %v660
      %694 = vst.msk [vmem:[%s251 + $0x3c] sm:$0xf] %vm678, %v661
      %695 = vst.msk [vmem:[%s251 + $0x40] sm:$0xf] %vm678, %v662
      %696 = vst.msk [vmem:[%s251 + $0x44] sm:$0xf] %vm678, %v663
      %697 = vst.msk [vmem:[%s251 + $0x48] sm:$0xf] %vm678, %v664
      %698 = vst.msk [vmem:[%s251 + $0x4c] sm:$0xf] %vm678, %v665
      %699 = vst.msk [vmem:[%s251 + $0x50] sm:$0xf] %vm678, %v666
      %700 = vst.msk [vmem:[%s251 + $0x54] sm:$0xf] %vm678, %v667
      %701 = vst.msk [vmem:[%s251 + $0x58] sm:$0xf] %vm678, %v668
      %702 = vst.msk [vmem:[%s251 + $0x5c] sm:$0xf] %vm678, %v669
      %703 = vst.msk [vmem:[%s251 + $0x60] sm:$0xf] %vm678, %v670
      %704 = vst.msk [vmem:[%s251 + $0x64] sm:$0xf] %vm678, %v671
      %705 = vst.msk [vmem:[%s251 + $0x68] sm:$0xf] %vm678, %v672
      %706 = vst.msk [vmem:[%s251 + $0x6c] sm:$0xf] %vm678, %v673
      %707 = vst.msk [vmem:[%s251 + $0x70] sm:$0xf] %vm678, %v674
      %708 = vst.msk [vmem:[%s251 + $0x74] sm:$0xf] %vm678, %v675
      %709 = vst.msk [vmem:[%s251 + $0x78] sm:$0xf] %vm678, %v676
      %710 = vst.msk [vmem:[%s251 + $0x7c] sm:$0xf] %vm678, %v677
      %p711 = scmp.lt.s32.totalorder %s18, 1
      %s712 = scalar_select %p711, %s18, 1
      %p713 = scmp.lt.s32.totalorder %s19, 0
      %s714 = scalar_select %p713, %s19, 0
      %s715 = smul.addr %s712, 32
      %s716 = sadd.s32 %s714, %s715
      %s717 = smul.addr %s716, 4
      %s718 = scalar_lea.vmem %s3, %s717
      // Predicated region
      $region33: #{tpu_custom_call.1} parent=31 // pred_check
        %p719 = pneg %p130
      $region34: #{tpu_custom_call.1} parent=31 // pred_check_branch
        %721 = sbr.rel (%p719) target = $region36
      $region35: #{tpu_custom_call.1} parent=31 // pred_region
        _
      $region36: #{tpu_custom_call.1} parent=31 // pred_fallthru
        _
    $region32: #{tpu_custom_call.1} parent=5 // pred_fallthru
      _
    %p722 = scmp.le.s32.totalorder 2, %s9
    // Predicated region
    $region37: #{tpu_custom_call.1} parent=5 // pred_check
      %p723 = pneg %p722
    $region38: #{tpu_custom_call.1} parent=5 // pred_check_branch
      %725 = sbr.rel (%p723) target = $region40
    $region39: #{tpu_custom_call.1} parent=5 // pred_region
      %s726 = ssub.s32 %s9, 2
      // Predicated region
      $region41: #{tpu_custom_call.1} parent=39 // pred_check
        %p727 = pneg %p136
      $region42: #{tpu_custom_call.1} parent=39 // pred_check_branch
        %729 = sbr.rel (%p727) target = $region44
      $region43: #{tpu_custom_call.1} parent=39 // pred_region
        %p730 = scmp.lt.s32.totalorder %s20, 1
        %s731 = scalar_select %p730, %s20, 1
        %p732 = scmp.lt.s32.totalorder %s21, 0
        %s733 = scalar_select %p732, %s21, 0
        %s734 = smul.addr %s731, 32
        %s735 = sadd.s32 %s733, %s734
        %s736 = smul.addr %s735, 4
        %s737 = scalar_lea.vmem %s3, %s736
      $region44: #{tpu_custom_call.1} parent=39 // pred_fallthru
        _
    $region40: #{tpu_custom_call.1} parent=5 // pred_fallthru
      _
  $region6: #{tpu_custom_call.1} parent=0 // loop_footer
    %s13 = sadd.s32 1, %s9
  $region7: #{tpu_custom_call.1} parent=0 // loop_footer_branch
    %8 = sbr.rel target = $region3
  $region8: #{tpu_custom_call.1} parent=0 // loop_exit
    _

</llo_original>
